<compile_context>
chip_gen: v7x
topology: tpu7x:2x2x1
jax: 0.10.0
libtpu: 0.0.40
codegen_flags: <defaults>
</compile_context>

<pallas_src>
import functools

import numpy as np
import jax
import jax.numpy as jnp
from jax import lax
from jax.experimental import pallas as pl
from jax.experimental.pallas import tpu as pltpu


# ----------------------------- Pallas kernel --------------------------------
def _make_kernel(H, W, nb):
    HW = H * W
    L = nb * HW                      # lane extent of one grid step

    def kernel(x_ref, masks_ref, w1_ref, b1_ref, w2_ref, b2_ref,
               w3_ref, ws_ref, b3_ref, o_ref, col_ref):
        Cb = w1_ref.shape[0]
        x2d = x_ref[...]                                              # (Cin, L)

        # conv1: 1x1 (BN scale pre-folded into w1) + bias + ReLU
        t1 = jnp.dot(w1_ref[...], x2d, preferred_element_type=jnp.float32)
        t1 = jnp.maximum(t1 + b1_ref[...], 0.0)                       # (Cb, L)

        # conv2: 3x3, padding=1, as ONE im2col matmul with K = 9*Cb.
        # Tap (di, dj) is a lane roll of t1 by (di-1)*W + (dj-1); the roll
        # wraps, so a precomputed per-tap mask zeroes out-of-image pixels
        # (left/right columns, top/bottom rows, cross-image leakage).  Each
        # masked tap is written directly into the VMEM scratch the MXU reads.
        for di in range(3):
            for dj in range(3):
                t = di * 3 + dj
                off = (di - 1) * W + (dj - 1)
                if off == 0:
                    tap = t1                                           # center tap
                else:
                    tap = pltpu.roll(t1, shift=(-off) % L, axis=1)
                    tap = tap * masks_ref[pl.ds(t, 1), :]              # (1,L) bcast
                col_ref[pl.ds(t * Cb, Cb), :] = tap

        t2 = jnp.dot(w2_ref[...], col_ref[...],
                     preferred_element_type=jnp.float32)
        t2 = jnp.maximum(t2 + b2_ref[...], 0.0)                        # (Cb, L)

        # conv3 (1x1) + projection shortcut as two accumulating dots,
        # combined bias, final ReLU.
        y = jnp.dot(w3_ref[...], t2, preferred_element_type=jnp.float32)
        y = y + jnp.dot(ws_ref[...], x2d, preferred_element_type=jnp.float32)
        o_ref[...] = jnp.maximum(y + b3_ref[...], 0.0)                 # (Cout, L)

    return kernel


# ---------------------- border / image-boundary masks ------------------------
@functools.lru_cache(maxsize=None)
def _make_masks(H, W, nb):
    """(9, nb*H*W) f32 masks, one row per 3x3 tap, combining column (left/right)
    and row (top/bottom) validity per image.  Built on the host once."""
    HW = H * W
    L = nb * HW
    p = np.arange(L)
    col = p % W
    row = (p % HW) // W
    masks = np.ones((9, L), np.float32)
    for di in range(3):
        for dj in range(3):
            m = np.ones(L, bool)
            if di == 0:
                m &= row >= 1
            if di == 2:
                m &= row <= H - 2
            if dj == 0:
                m &= col >= 1
            if dj == 2:
                m &= col <= W - 2
            masks[di * 3 + dj] = m.astype(np.float32)
    return masks


# ------------------------- parameter pre-packing ------------------------------
def pack_params(params):
    """Fold BN scales into conv weights and pre-pack for the kernel.
    Call ONCE outside the per-forward hot path."""
    (w1, s1, b1, w2, s2, b2, w3, s3, b3, ws, ss, bs) = params
    Cin, Cb = w1.shape
    Cout = w3.shape[1]
    w1t = (w1 * s1[None, :]).T                                        # (Cb, Cin)
    w2t = (w2 * s2[None, None, None, :]).reshape(9 * Cb, Cb).T        # (Cb, 9*Cb)
    w3t = (w3 * s3[None, :]).T                                        # (Cout, Cb)
    wst = (ws * ss[None, :]).T                                        # (Cout, Cin)
    b1c = b1.reshape(Cb, 1)
    b2c = b2.reshape(Cb, 1)
    b3s = (b3 + bs).reshape(Cout, 1)                                  # combined
    return (w1t, b1c, w2t, b2c, w3t, wst, b3s)


# ------------------------------- wrapper -------------------------------------
@functools.partial(jax.jit, static_argnames=("grid_steps",))
def bottleneck_block(x_nchw, packed, *, grid_steps=None):
    x = x_nchw.astype(jnp.float32)
    N, Cin, H, W = x.shape
    HW = H * W
    (w1t, b1c, w2t, b2c, w3t, wst, b3s) = packed
    Cb = w1t.shape[0]
    Cout = w3t.shape[0]

    if grid_steps is None:
        # Tiny batches: collapse fully (single-TC v5e/v6e — grid overhead
        # dominates).  N >= 4: keep 2 parallel steps so both v7x TensorCores
        # get work while still amortizing per-step overhead.
        grid_steps = 1 if N < 4 else 2
    assert N % grid_steps == 0, (N, grid_steps)
    nb = N // grid_steps                     # images per grid step
    L = nb * HW                              # lane extent per step (mult. of 128)

    masks = jnp.asarray(_make_masks(H, W, nb))                        # (9, L)

    # NCHW -> (Cin, N*HW): one tiny HBM transpose of the (N, C) axes.
    x2d = jnp.transpose(x, (1, 0, 2, 3)).reshape(Cin, N * HW)

    def _const(a):
        return pl.BlockSpec(a.shape, lambda g: (0, 0))

    out2d = pl.pallas_call(
        _make_kernel(H, W, nb),
        out_shape=jax.ShapeDtypeStruct((Cout, N * HW), jnp.float32),
        grid_spec=pltpu.PrefetchScalarGridSpec(
            num_scalar_prefetch=0,
            grid=(grid_steps,),
            in_specs=[
                pl.BlockSpec((Cin, L), lambda g: (0, g)),             # x slab
                _const(masks),
                _const(w1t), _const(b1c),
                _const(w2t), _const(b2c),
                _const(w3t), _const(wst), _const(b3s),
            ],
            out_specs=pl.BlockSpec((Cout, L), lambda g: (0, g)),
            scratch_shapes=[pltpu.VMEM((9 * Cb, L), jnp.float32)],    # im2col buf
        ),
        compiler_params=pltpu.CompilerParams(
            dimension_semantics=("parallel",)),
    )(x2d, masks, w1t, b1c, w2t, b2c, w3t, wst, b3s)

    return jnp.transpose(out2d.reshape(Cout, N, H, W), (1, 0, 2, 3))


# -------------------------- parameter construction ---------------------------
def _msra_std(fan_out):
    # kaiming_normal_(mode='fan_out', nonlinearity='relu') == N(0, sqrt(2/fan_out))
    return (2.0 / fan_out) ** 0.5


def init_params(key, Cin, Cb, Cout, eps=1e-5):
    k = jax.random.split(key, 20)
    w1 = jax.random.normal(k[0], (Cin, Cb), jnp.float32) * _msra_std(Cb)
    w2 = jax.random.normal(k[1], (3, 3, Cb, Cb), jnp.float32) * _msra_std(Cb * 9)
    w3 = jax.random.normal(k[2], (Cb, Cout), jnp.float32) * _msra_std(Cout)
    ws = jax.random.normal(k[3], (Cin, Cout), jnp.float32) * _msra_std(Cout)

    def bn_fold(kg, kb, km, kv, C):
        gamma = 1.0 + 0.1 * jax.random.normal(kg, (C,), jnp.float32)
        beta = 0.1 * jax.random.normal(kb, (C,), jnp.float32)
        mean = 0.1 * jax.random.normal(km, (C,), jnp.float32)
        var = 1.0 + 0.1 * jax.random.uniform(kv, (C,), jnp.float32)
        scale = gamma * lax.rsqrt(var + eps)
        bias = beta - mean * scale
        return scale, bias

    s1, b1 = bn_fold(k[4], k[5], k[6], k[7], Cb)
    s2, b2 = bn_fold(k[8], k[9], k[10], k[11], Cb)
    s3, b3 = bn_fold(k[12], k[13], k[14], k[15], Cout)
    ss, bs = bn_fold(k[16], k[17], k[18], k[19], Cout)
    return (w1, s1, b1, w2, s2, b2, w3, s3, b3, ws, ss, bs)


# ---------------------------- pure-JAX reference ------------------------------
def ref_forward(x_nchw, params):
    x = jnp.transpose(x_nchw, (0, 2, 3, 1)).astype(jnp.float32)
    (w1, s1, b1, w2, s2, b2, w3, s3, b3, ws, ss, bs) = params
    dn = ('NHWC', 'HWIO', 'NHWC')

    def conv1x1(a, w):
        return lax.conv_general_dilated(a, w.reshape(1, 1, *w.shape),
                                        (1, 1), 'VALID', dimension_numbers=dn)

    def aff(a, s, b):
        return a * s.reshape(1, 1, 1, -1) + b.reshape(1, 1, 1, -1)

    t = jnp.maximum(aff(conv1x1(x, w1), s1, b1), 0.0)
    t = lax.conv_general_dilated(t, w2, (1, 1), ((1, 1), (1, 1)),
                                 dimension_numbers=dn)
    t = jnp.maximum(aff(t, s2, b2), 0.0)
    t = aff(conv1x1(t, w3), s3, b3)
    sc = aff(conv1x1(x, ws), ss, bs)
    out = jnp.maximum(t + sc, 0.0)
    return jnp.transpose(out, (0, 3, 1, 2))


# ----------------------------------- main -------------------------------------
if __name__ == "__main__":
    key = jax.random.PRNGKey(0)
    kx, kp = jax.random.split(key)

    N, Cin, H, W = 2, 16, 16, 16
    Cb, Cout = 8, 32                    # bottleneck_channels, out_channels

    x = jax.random.normal(kx, (N, Cin, H, W), jnp.float32)
    params = init_params(kp, Cin, Cb, Cout)
    packed = pack_params(params)        # BN fold / repack: once, outside hot path

    out = jax.block_until_ready(bottleneck_block(x, packed))
    ref = ref_forward(x, params)

    assert out.shape == (N, Cout, H, W), out.shape
    max_err = float(jnp.max(jnp.abs(out - ref)))
    assert jnp.allclose(out, ref, atol=5e-4, rtol=5e-4), f"max_err={max_err}"

    print("KERNEL_OK")
</pallas_src>

<mosaic_0001>
module attributes {stable_mosaic.version = 11 : i64} {
  func.func @kernel(%arg0: i32, %arg1: memref<16x512xf32, #tpu.memory_space<vmem>>, %arg2: memref<9x512xf32, #tpu.memory_space<vmem>>, %arg3: memref<8x16xf32, #tpu.memory_space<vmem>>, %arg4: memref<8x1xf32, #tpu.memory_space<vmem>>, %arg5: memref<8x72xf32, #tpu.memory_space<vmem>>, %arg6: memref<8x1xf32, #tpu.memory_space<vmem>>, %arg7: memref<32x8xf32, #tpu.memory_space<vmem>>, %arg8: memref<32x16xf32, #tpu.memory_space<vmem>>, %arg9: memref<32x1xf32, #tpu.memory_space<vmem>>, %arg10: memref<32x512xf32, #tpu.memory_space<vmem>>, %arg11: memref<72x512xf32, #tpu.memory_space<vmem>>) attributes {dimension_semantics = [#tpu.dimension_semantics<parallel>], iteration_bounds = array<i64: 1>, scalar_prefetch = 0 : i64, scratch_operands = 1 : i64, tpu.core_type = #tpu.core_type<tc>, window_params = [{transform_indices = @transform_0, window_bounds = array<i64: 16, 512>}, {pipeline_mode = #tpu.pipeline_mode<synchronous>, transform_indices = @transform_1, window_bounds = array<i64: 9, 512>}, {pipeline_mode = #tpu.pipeline_mode<synchronous>, transform_indices = @transform_2, window_bounds = array<i64: 8, 16>}, {pipeline_mode = #tpu.pipeline_mode<synchronous>, transform_indices = @transform_3, window_bounds = array<i64: 8, 1>}, {pipeline_mode = #tpu.pipeline_mode<synchronous>, transform_indices = @transform_4, window_bounds = array<i64: 8, 72>}, {pipeline_mode = #tpu.pipeline_mode<synchronous>, transform_indices = @transform_5, window_bounds = array<i64: 8, 1>}, {pipeline_mode = #tpu.pipeline_mode<synchronous>, transform_indices = @transform_6, window_bounds = array<i64: 32, 8>}, {pipeline_mode = #tpu.pipeline_mode<synchronous>, transform_indices = @transform_7, window_bounds = array<i64: 32, 16>}, {pipeline_mode = #tpu.pipeline_mode<synchronous>, transform_indices = @transform_8, window_bounds = array<i64: 32, 1>}, {transform_indices = @transform_9, window_bounds = array<i64: 32, 512>}]} {
    %c0 = arith.constant 0 : index
    %c0_0 = arith.constant 0 : index
    %0 = vector.load %arg1[%c0, %c0_0] : memref<16x512xf32, #tpu.memory_space<vmem>>, vector<16x512xf32>
    %c0_1 = arith.constant 0 : index
    %c0_2 = arith.constant 0 : index
    %1 = vector.load %arg3[%c0_1, %c0_2] : memref<8x16xf32, #tpu.memory_space<vmem>>, vector<8x16xf32>
    %cst = arith.constant dense<0.000000e+00> : vector<8x512xf32>
    %2 = tpu.matmul %1, %0, %cst {dimension_numbers = #tpu.dot_dimension_numbers<[1], [0], [0], [1], [0, 0, 1, 1], [], []>} : vector<8x16xf32>, vector<16x512xf32>, vector<8x512xf32> -> vector<8x512xf32>
    %c0_3 = arith.constant 0 : index
    %c0_4 = arith.constant 0 : index
    %3 = vector.load %arg4[%c0_3, %c0_4] : memref<8x1xf32, #tpu.memory_space<vmem>>, vector<8x1xf32>
    %4 = vector.broadcast %3 : vector<8x1xf32> to vector<8x512xf32>
    %5 = arith.addf %2, %4 : vector<8x512xf32>
    %cst_5 = arith.constant 0.000000e+00 : f32
    %6 = vector.broadcast %cst_5 : f32 to vector<8x512xf32>
    %7 = arith.maximumf %5, %6 : vector<8x512xf32>
    %c17_i32 = arith.constant 17 : i32
    %8 = tpu.dynamic_rotate %7 by %c17_i32 dim 1 : vector<8x512xf32>, i32 -> vector<8x512xf32>
    %c0_6 = arith.constant 0 : index
    %c0_7 = arith.constant 0 : index
    %9 = vector.load %arg2[%c0_6, %c0_7] : memref<9x512xf32, #tpu.memory_space<vmem>>, vector<1x512xf32>
    %10 = vector.broadcast %9 : vector<1x512xf32> to vector<8x512xf32>
    %11 = arith.mulf %8, %10 : vector<8x512xf32>
    %c0_8 = arith.constant 0 : index
    %c0_9 = arith.constant 0 : index
    %12 = vector.load %arg11[%c0_8, %c0_9] : memref<72x512xf32, #tpu.memory_space<vmem>>, vector<8x512xf32>
    tpu.vector_store %arg11[%c0_8, %c0_9], %11 {strides = array<i32>} : memref<72x512xf32, #tpu.memory_space<vmem>>, vector<8x512xf32>,
    %c16_i32 = arith.constant 16 : i32
    %13 = tpu.dynamic_rotate %7 by %c16_i32 dim 1 : vector<8x512xf32>, i32 -> vector<8x512xf32>
    %c1 = arith.constant 1 : index
    %c0_10 = arith.constant 0 : index
    %14 = vector.load %arg2[%c1, %c0_10] : memref<9x512xf32, #tpu.memory_space<vmem>>, vector<1x512xf32>
    %15 = vector.broadcast %14 : vector<1x512xf32> to vector<8x512xf32>
    %16 = arith.mulf %13, %15 : vector<8x512xf32>
    %c8 = arith.constant 8 : index
    %c0_11 = arith.constant 0 : index
    %17 = vector.load %arg11[%c8, %c0_11] : memref<72x512xf32, #tpu.memory_space<vmem>>, vector<8x512xf32>
    tpu.vector_store %arg11[%c8, %c0_11], %16 {strides = array<i32>} : memref<72x512xf32, #tpu.memory_space<vmem>>, vector<8x512xf32>,
    %c15_i32 = arith.constant 15 : i32
    %18 = tpu.dynamic_rotate %7 by %c15_i32 dim 1 : vector<8x512xf32>, i32 -> vector<8x512xf32>
    %c2 = arith.constant 2 : index
    %c0_12 = arith.constant 0 : index
    %19 = vector.load %arg2[%c2, %c0_12] : memref<9x512xf32, #tpu.memory_space<vmem>>, vector<1x512xf32>
    %20 = vector.broadcast %19 : vector<1x512xf32> to vector<8x512xf32>
    %21 = arith.mulf %18, %20 : vector<8x512xf32>
    %c16 = arith.constant 16 : index
    %c0_13 = arith.constant 0 : index
    %22 = vector.load %arg11[%c16, %c0_13] : memref<72x512xf32, #tpu.memory_space<vmem>>, vector<8x512xf32>
    tpu.vector_store %arg11[%c16, %c0_13], %21 {strides = array<i32>} : memref<72x512xf32, #tpu.memory_space<vmem>>, vector<8x512xf32>,
    %c1_i32 = arith.constant 1 : i32
    %23 = tpu.dynamic_rotate %7 by %c1_i32 dim 1 : vector<8x512xf32>, i32 -> vector<8x512xf32>
    %c3 = arith.constant 3 : index
    %c0_14 = arith.constant 0 : index
    %24 = vector.load %arg2[%c3, %c0_14] : memref<9x512xf32, #tpu.memory_space<vmem>>, vector<1x512xf32>
    %25 = vector.broadcast %24 : vector<1x512xf32> to vector<8x512xf32>
    %26 = arith.mulf %23, %25 : vector<8x512xf32>
    %c24 = arith.constant 24 : index
    %c0_15 = arith.constant 0 : index
    %27 = vector.load %arg11[%c24, %c0_15] : memref<72x512xf32, #tpu.memory_space<vmem>>, vector<8x512xf32>
    tpu.vector_store %arg11[%c24, %c0_15], %26 {strides = array<i32>} : memref<72x512xf32, #tpu.memory_space<vmem>>, vector<8x512xf32>,
    %c32 = arith.constant 32 : index
    %c0_16 = arith.constant 0 : index
    %28 = vector.load %arg11[%c32, %c0_16] : memref<72x512xf32, #tpu.memory_space<vmem>>, vector<8x512xf32>
    tpu.vector_store %arg11[%c32, %c0_16], %7 {strides = array<i32>} : memref<72x512xf32, #tpu.memory_space<vmem>>, vector<8x512xf32>,
    %c511_i32 = arith.constant 511 : i32
    %29 = tpu.dynamic_rotate %7 by %c511_i32 dim 1 : vector<8x512xf32>, i32 -> vector<8x512xf32>
    %c5 = arith.constant 5 : index
    %c0_17 = arith.constant 0 : index
    %30 = vector.load %arg2[%c5, %c0_17] : memref<9x512xf32, #tpu.memory_space<vmem>>, vector<1x512xf32>
    %31 = vector.broadcast %30 : vector<1x512xf32> to vector<8x512xf32>
    %32 = arith.mulf %29, %31 : vector<8x512xf32>
    %c40 = arith.constant 40 : index
    %c0_18 = arith.constant 0 : index
    %33 = vector.load %arg11[%c40, %c0_18] : memref<72x512xf32, #tpu.memory_space<vmem>>, vector<8x512xf32>
    tpu.vector_store %arg11[%c40, %c0_18], %32 {strides = array<i32>} : memref<72x512xf32, #tpu.memory_space<vmem>>, vector<8x512xf32>,
    %c497_i32 = arith.constant 497 : i32
    %34 = tpu.dynamic_rotate %7 by %c497_i32 dim 1 : vector<8x512xf32>, i32 -> vector<8x512xf32>
    %c6 = arith.constant 6 : index
    %c0_19 = arith.constant 0 : index
    %35 = vector.load %arg2[%c6, %c0_19] : memref<9x512xf32, #tpu.memory_space<vmem>>, vector<1x512xf32>
    %36 = vector.broadcast %35 : vector<1x512xf32> to vector<8x512xf32>
    %37 = arith.mulf %34, %36 : vector<8x512xf32>
    %c48 = arith.constant 48 : index
    %c0_20 = arith.constant 0 : index
    %38 = vector.load %arg11[%c48, %c0_20] : memref<72x512xf32, #tpu.memory_space<vmem>>, vector<8x512xf32>
    tpu.vector_store %arg11[%c48, %c0_20], %37 {strides = array<i32>} : memref<72x512xf32, #tpu.memory_space<vmem>>, vector<8x512xf32>,
    %c496_i32 = arith.constant 496 : i32
    %39 = tpu.dynamic_rotate %7 by %c496_i32 dim 1 : vector<8x512xf32>, i32 -> vector<8x512xf32>
    %c7 = arith.constant 7 : index
    %c0_21 = arith.constant 0 : index
    %40 = vector.load %arg2[%c7, %c0_21] : memref<9x512xf32, #tpu.memory_space<vmem>>, vector<1x512xf32>
    %41 = vector.broadcast %40 : vector<1x512xf32> to vector<8x512xf32>
    %42 = arith.mulf %39, %41 : vector<8x512xf32>
    %c56 = arith.constant 56 : index
    %c0_22 = arith.constant 0 : index
    %43 = vector.load %arg11[%c56, %c0_22] : memref<72x512xf32, #tpu.memory_space<vmem>>, vector<8x512xf32>
    tpu.vector_store %arg11[%c56, %c0_22], %42 {strides = array<i32>} : memref<72x512xf32, #tpu.memory_space<vmem>>, vector<8x512xf32>,
    %c495_i32 = arith.constant 495 : i32
    %44 = tpu.dynamic_rotate %7 by %c495_i32 dim 1 : vector<8x512xf32>, i32 -> vector<8x512xf32>
    %c8_23 = arith.constant 8 : index
    %c0_24 = arith.constant 0 : index
    %45 = vector.load %arg2[%c8_23, %c0_24] : memref<9x512xf32, #tpu.memory_space<vmem>>, vector<1x512xf32>
    %46 = vector.broadcast %45 : vector<1x512xf32> to vector<8x512xf32>
    %47 = arith.mulf %44, %46 : vector<8x512xf32>
    %c64 = arith.constant 64 : index
    %c0_25 = arith.constant 0 : index
    %48 = vector.load %arg11[%c64, %c0_25] : memref<72x512xf32, #tpu.memory_space<vmem>>, vector<8x512xf32>
    tpu.vector_store %arg11[%c64, %c0_25], %47 {strides = array<i32>} : memref<72x512xf32, #tpu.memory_space<vmem>>, vector<8x512xf32>,
    %c0_26 = arith.constant 0 : index
    %c0_27 = arith.constant 0 : index
    %49 = vector.load %arg5[%c0_26, %c0_27] : memref<8x72xf32, #tpu.memory_space<vmem>>, vector<8x72xf32>
    %c0_28 = arith.constant 0 : index
    %c0_29 = arith.constant 0 : index
    %50 = vector.load %arg11[%c0_28, %c0_29] : memref<72x512xf32, #tpu.memory_space<vmem>>, vector<72x512xf32>
    %cst_30 = arith.constant dense<0.000000e+00> : vector<8x512xf32>
    %51 = tpu.matmul %49, %50, %cst_30 {dimension_numbers = #tpu.dot_dimension_numbers<[1], [0], [0], [1], [0, 0, 1, 1], [], []>} : vector<8x72xf32>, vector<72x512xf32>, vector<8x512xf32> -> vector<8x512xf32>
    %c0_31 = arith.constant 0 : index
    %c0_32 = arith.constant 0 : index
    %52 = vector.load %arg6[%c0_31, %c0_32] : memref<8x1xf32, #tpu.memory_space<vmem>>, vector<8x1xf32>
    %53 = vector.broadcast %52 : vector<8x1xf32> to vector<8x512xf32>
    %54 = arith.addf %51, %53 : vector<8x512xf32>
    %cst_33 = arith.constant 0.000000e+00 : f32
    %55 = vector.broadcast %cst_33 : f32 to vector<8x512xf32>
    %56 = arith.maximumf %54, %55 : vector<8x512xf32>
    %c0_34 = arith.constant 0 : index
    %c0_35 = arith.constant 0 : index
    %57 = vector.load %arg7[%c0_34, %c0_35] : memref<32x8xf32, #tpu.memory_space<vmem>>, vector<32x8xf32>
    %cst_36 = arith.constant dense<0.000000e+00> : vector<32x512xf32>
    %58 = tpu.matmul %57, %56, %cst_36 {dimension_numbers = #tpu.dot_dimension_numbers<[1], [0], [0], [1], [0, 0, 1, 1], [], []>} : vector<32x8xf32>, vector<8x512xf32>, vector<32x512xf32> -> vector<32x512xf32>
    %c0_37 = arith.constant 0 : index
    %c0_38 = arith.constant 0 : index
    %59 = vector.load %arg8[%c0_37, %c0_38] : memref<32x16xf32, #tpu.memory_space<vmem>>, vector<32x16xf32>
    %cst_39 = arith.constant dense<0.000000e+00> : vector<32x512xf32>
    %60 = tpu.matmul %59, %0, %cst_39 {dimension_numbers = #tpu.dot_dimension_numbers<[1], [0], [0], [1], [0, 0, 1, 1], [], []>} : vector<32x16xf32>, vector<16x512xf32>, vector<32x512xf32> -> vector<32x512xf32>
    %61 = arith.addf %58, %60 : vector<32x512xf32>
    %c0_40 = arith.constant 0 : index
    %c0_41 = arith.constant 0 : index
    %62 = vector.load %arg9[%c0_40, %c0_41] : memref<32x1xf32, #tpu.memory_space<vmem>>, vector<32x1xf32>
    %63 = vector.broadcast %62 : vector<32x1xf32> to vector<32x512xf32>
    %64 = arith.addf %61, %63 : vector<32x512xf32>
    %cst_42 = arith.constant 0.000000e+00 : f32
    %65 = vector.broadcast %cst_42 : f32 to vector<32x512xf32>
    %66 = arith.maximumf %64, %65 : vector<32x512xf32>
    %c0_43 = arith.constant 0 : index
    %c0_44 = arith.constant 0 : index
    %67 = vector.load %arg10[%c0_43, %c0_44] : memref<32x512xf32, #tpu.memory_space<vmem>>, vector<32x512xf32>
    tpu.vector_store %arg10[%c0_43, %c0_44], %66 {strides = array<i32>} : memref<32x512xf32, #tpu.memory_space<vmem>>, vector<32x512xf32>,
    return
  }
  func.func @transform_0(%arg0: i32) -> (i32, i32) {
    %c0_i32 = arith.constant 0 : i32
    %c0_i32_0 = arith.constant 0 : i32
    return %c0_i32, %arg0 : i32, i32
  }
  func.func @transform_1(%arg0: i32) -> (i32, i32) {
    %c0_i32 = arith.constant 0 : i32
    %c0_i32_0 = arith.constant 0 : i32
    %c0_i32_1 = arith.constant 0 : i32
    return %c0_i32, %c0_i32_0 : i32, i32
  }
  func.func @transform_2(%arg0: i32) -> (i32, i32) {
    %c0_i32 = arith.constant 0 : i32
    %c0_i32_0 = arith.constant 0 : i32
    %c0_i32_1 = arith.constant 0 : i32
    return %c0_i32, %c0_i32_0 : i32, i32
  }
  func.func @transform_3(%arg0: i32) -> (i32, i32) {
    %c0_i32 = arith.constant 0 : i32
    %c0_i32_0 = arith.constant 0 : i32
    %c0_i32_1 = arith.constant 0 : i32
    return %c0_i32, %c0_i32_0 : i32, i32
  }
  func.func @transform_4(%arg0: i32) -> (i32, i32) {
    %c0_i32 = arith.constant 0 : i32
    %c0_i32_0 = arith.constant 0 : i32
    %c0_i32_1 = arith.constant 0 : i32
    return %c0_i32, %c0_i32_0 : i32, i32
  }
  func.func @transform_5(%arg0: i32) -> (i32, i32) {
    %c0_i32 = arith.constant 0 : i32
    %c0_i32_0 = arith.constant 0 : i32
    %c0_i32_1 = arith.constant 0 : i32
    return %c0_i32, %c0_i32_0 : i32, i32
  }
  func.func @transform_6(%arg0: i32) -> (i32, i32) {
    %c0_i32 = arith.constant 0 : i32
    %c0_i32_0 = arith.constant 0 : i32
    %c0_i32_1 = arith.constant 0 : i32
    return %c0_i32, %c0_i32_0 : i32, i32
  }
  func.func @transform_7(%arg0: i32) -> (i32, i32) {
    %c0_i32 = arith.constant 0 : i32
    %c0_i32_0 = arith.constant 0 : i32
    %c0_i32_1 = arith.constant 0 : i32
    return %c0_i32, %c0_i32_0 : i32, i32
  }
  func.func @transform_8(%arg0: i32) -> (i32, i32) {
    %c0_i32 = arith.constant 0 : i32
    %c0_i32_0 = arith.constant 0 : i32
    %c0_i32_1 = arith.constant 0 : i32
    return %c0_i32, %c0_i32_0 : i32, i32
  }
  func.func @transform_9(%arg0: i32) -> (i32, i32) {
    %c0_i32 = arith.constant 0 : i32
    %c0_i32_0 = arith.constant 0 : i32
    return %c0_i32, %arg0 : i32, i32
  }
}

</mosaic_0001>

<llo_original>
// kernel: bottleneck_block.1
$region0: #{bottleneck_block.1}
  #allocation0 [shape = 'u32[]', space=smem, size = 0x4, offset = 0x4, fixed_abs, tag = 'smem constant byte address 0x4 - core index']
  #allocation1 [shape = 'u32[144,128]{1,0:T(1,128)}', space=vmem, size = 0x12000, scoped, tag = 'internal scratch']
  #allocation2 [shape = 'f32[72,512]{1,0:T(8,128)}', space=vmem, size = 0x24000, scoped, tag = 'scratch operand']
  %s0 = inlined_call_operand.vmem [shape: f32[16,512], index: 0, kind: input, shape index: {}]
  %s1 = inlined_call_operand.vmem [shape: f32[9,512], index: 1, kind: input, shape index: {}]
  %s2 = inlined_call_operand.vmem [shape: f32[8,16], index: 2, kind: input, shape index: {}]
  %s3 = inlined_call_operand.vmem [shape: f32[8,1], index: 3, kind: input, shape index: {}]
  %s4 = inlined_call_operand.vmem [shape: f32[8,72], index: 4, kind: input, shape index: {}]
  %s5 = inlined_call_operand.vmem [shape: f32[8,1], index: 5, kind: input, shape index: {}]
  %s6 = inlined_call_operand.vmem [shape: f32[32,8], index: 6, kind: input, shape index: {}]
  %s7 = inlined_call_operand.vmem [shape: f32[32,16], index: 7, kind: input, shape index: {}]
  %s8 = inlined_call_operand.vmem [shape: f32[32,1], index: 8, kind: input, shape index: {}]
  %s9 = inlined_call_operand.vmem [shape: f32[32,512], index: 9, kind: output, shape index: {}]
  %s10 = sld [smem:[#allocation0]]
  $region46: #{bottleneck_block.1} parent=0
    _
  %s12 = ssub.s32 1, %s10
  %s13 = scalar_select 0, %s12, %s10
  // Predicated region
  $region2: #{bottleneck_block.1} parent=0 // pred_check
    _
  $region3: #{bottleneck_block.1} parent=0 // pred_check_branch
    %15 = sbr.rel (0) target = $region5
  $region4: #{bottleneck_block.1} parent=0 // pred_region
    _
  $region5: #{bottleneck_block.1} parent=0 // pred_fallthru
    _
  // Predicated region
  $region6: #{bottleneck_block.1} parent=0 // pred_check
    _
  $region7: #{bottleneck_block.1} parent=0 // pred_check_branch
    %17 = sbr.rel (0) target = $region9
  $region8: #{bottleneck_block.1} parent=0 // pred_region
    _
  $region9: #{bottleneck_block.1} parent=0 // pred_fallthru
    _
  // Predicated region
  $region10: #{bottleneck_block.1} parent=0 // pred_check
    _
  $region11: #{bottleneck_block.1} parent=0 // pred_check_branch
    %19 = sbr.rel (0) target = $region13
  $region12: #{bottleneck_block.1} parent=0 // pred_region
    _
  $region13: #{bottleneck_block.1} parent=0 // pred_fallthru
    _
  // Predicated region
  $region14: #{bottleneck_block.1} parent=0 // pred_check
    _
  $region15: #{bottleneck_block.1} parent=0 // pred_check_branch
    %21 = sbr.rel (0) target = $region17
  $region16: #{bottleneck_block.1} parent=0 // pred_region
    _
  $region17: #{bottleneck_block.1} parent=0 // pred_fallthru
    _
  // Predicated region
  $region18: #{bottleneck_block.1} parent=0 // pred_check
    _
  $region19: #{bottleneck_block.1} parent=0 // pred_check_branch
    %23 = sbr.rel (0) target = $region21
  $region20: #{bottleneck_block.1} parent=0 // pred_region
    _
  $region21: #{bottleneck_block.1} parent=0 // pred_fallthru
    _
  // Predicated region
  $region22: #{bottleneck_block.1} parent=0 // pred_check
    _
  $region23: #{bottleneck_block.1} parent=0 // pred_check_branch
    %25 = sbr.rel (0) target = $region25
  $region24: #{bottleneck_block.1} parent=0 // pred_region
    _
  $region25: #{bottleneck_block.1} parent=0 // pred_fallthru
    _
  // Predicated region
  $region26: #{bottleneck_block.1} parent=0 // pred_check
    _
  $region27: #{bottleneck_block.1} parent=0 // pred_check_branch
    %27 = sbr.rel (0) target = $region29
  $region28: #{bottleneck_block.1} parent=0 // pred_region
    _
  $region29: #{bottleneck_block.1} parent=0 // pred_fallthru
    _
  // Predicated region
  $region30: #{bottleneck_block.1} parent=0 // pred_check
    _
  $region31: #{bottleneck_block.1} parent=0 // pred_check_branch
    %29 = sbr.rel (0) target = $region33
  $region32: #{bottleneck_block.1} parent=0 // pred_region
    _
  $region33: #{bottleneck_block.1} parent=0 // pred_fallthru
    _
  // Predicated region
  $region34: #{bottleneck_block.1} parent=0 // pred_check
    _
  $region35: #{bottleneck_block.1} parent=0 // pred_check_branch
    %31 = sbr.rel (0) target = $region37
  $region36: #{bottleneck_block.1} parent=0 // pred_region
    _
  $region37: #{bottleneck_block.1} parent=0 // pred_fallthru
    _
  %v32 = vld [vmem:[%s0] sm:$0xff]
  %v33 = vld [vmem:[%s0 + $0x8] sm:$0xff]
  %v34 = vld [vmem:[%s0 + $0x10] sm:$0xff]
  %v35 = vld [vmem:[%s0 + $0x18] sm:$0xff]
  %v36 = vld [vmem:[%s0 + $0x20] sm:$0xff]
  %v37 = vld [vmem:[%s0 + $0x28] sm:$0xff]
  %v38 = vld [vmem:[%s0 + $0x30] sm:$0xff]
  %v39 = vld [vmem:[%s0 + $0x38] sm:$0xff]
  %v40 = vld [vmem:[%s2] sm:$0xff]
  %v41 = vld [vmem:[%s3] sm:$0xff]
  %43 = vset.pattern.permute.xlu0 0
  %44 = vperm.xlu0 %43, %v41
  %v45 = vpop.permute.xlu0 %44
  %vm47 = vcmask 130048
  %v49 = vsel %vm47, %v40, 0
  %51 = vmatprep.subr.mxu0 %v33
  %52 = vmatpush1.msra.mxu0 %v32
  %53 = vmatprep.subr.mxu0 %v37
  %54 = vmatpush1.msra.mxu0 %v36
  %55 = vmatprep.subr.mxu0 0.0
  %56 = vmatpush1.msra.mxu0 0.0
  %57 = vmatprep.subr.mxu0 0.0
  %58 = vmatpush1.msra.mxu0 0.0
  %59 = vmatprep.subr.mxu0 0.0
  %60 = vmatpush1.msra.mxu0 0.0
  %61 = vmatprep.subr.mxu0 0.0
  %62 = vmatpush1.msra.mxu0 0.0
  %63 = vmatprep.subr.mxu0 0.0
  %64 = vmatpush1.msra.mxu0 0.0
  %65 = vmatprep.subr.mxu0 0.0
  %66 = vmatpush1.msra.mxu0 0.0
  %67 = vmatprep.subr.mxu0 0.0
  %68 = vmatpush1.msra.mxu0 0.0
  %69 = vmatprep.subr.mxu0 0.0
  %70 = vmatpush1.msra.mxu0 0.0
  %71 = vmatprep.subr.mxu0 0.0
  %72 = vmatpush1.msra.mxu0 0.0
  %73 = vmatprep.subr.mxu0 0.0
  %74 = vmatpush1.msra.mxu0 0.0
  %75 = vmatprep.subr.mxu0 0.0
  %76 = vmatpush1.msra.mxu0 0.0
  %77 = vmatprep.subr.mxu0 0.0
  %78 = vmatpush1.msra.mxu0 0.0
  %79 = vmatprep.subr.mxu0 0.0
  %80 = vmatpush1.msra.mxu0 0.0
  %81 = vmatprep.subr.mxu0 0.0
  %82 = vmatpush1.msra.mxu0 0.0
  %83 = vmatprep.subr.mxu0 0.0
  %84 = vmatpush1.msra.mxu0 0.0
  %85 = vmatprep.subr.mxu0 0.0
  %86 = vmatpush1.msra.mxu0 0.0
  %87 = vmatprep.subr.mxu0 0.0
  %88 = vmatpush1.msra.mxu0 0.0
  %89 = vmatprep.subr.mxu0 0.0
  %90 = vmatpush1.msra.mxu0 0.0
  %91 = vmatprep.subr.mxu0 0.0
  %92 = vmatpush1.msra.mxu0 0.0
  %93 = vmatprep.subr.mxu0 0.0
  %94 = vmatpush1.msra.mxu0 0.0
  %95 = vmatprep.subr.mxu0 0.0
  %96 = vmatpush1.msra.mxu0 0.0
  %97 = vmatprep.subr.mxu0 0.0
  %98 = vmatpush1.msra.mxu0 0.0
  %99 = vmatprep.subr.mxu0 0.0
  %100 = vmatpush1.msra.mxu0 0.0
  %101 = vmatprep.subr.mxu0 0.0
  %102 = vmatpush1.msra.mxu0 0.0
  %103 = vmatprep.subr.mxu0 0.0
  %104 = vmatpush1.msra.mxu0 0.0
  %105 = vmatprep.subr.mxu0 0.0
  %106 = vmatpush1.msra.mxu0 0.0
  %107 = vmatprep.subr.mxu0 0.0
  %108 = vmatpush1.msra.mxu0 0.0
  %109 = vmatprep.subr.mxu0 0.0
  %110 = vmatpush1.msra.mxu0 0.0
  %111 = vmatprep.subr.mxu0 0.0
  %112 = vmatpush1.msra.mxu0 0.0
  %113 = vmatprep.subr.mxu0 0.0
  %114 = vmatpush1.msra.mxu0 0.0
  %115 = vmatprep.mubr.f32.mxu0 0.0
  %116 = vmatmul.mubr.f32.gmra.mrb[0].mxu0 %v49
  %v117 = vpop.f32.mrb[0].mxu0
  %v118 = vadd.f32 %v45, %v117
  %v119 = vpop.f32.mrb[0].mxu0
  %v120 = vadd.f32 %v45, %v119
  %121 = vdwg.mxu0
  %122 = vmatprep.subr.mxu0 %v35
  %123 = vmatpush1.msra.mxu0 %v34
  %124 = vmatprep.subr.mxu0 %v39
  %125 = vmatpush1.msra.mxu0 %v38
  %126 = vmatprep.subr.mxu0 0.0
  %127 = vmatpush1.msra.mxu0 0.0
  %128 = vmatprep.subr.mxu0 0.0
  %129 = vmatpush1.msra.mxu0 0.0
  %130 = vmatprep.subr.mxu0 0.0
  %131 = vmatpush1.msra.mxu0 0.0
  %132 = vmatprep.subr.mxu0 0.0
  %133 = vmatpush1.msra.mxu0 0.0
  %134 = vmatprep.subr.mxu0 0.0
  %135 = vmatpush1.msra.mxu0 0.0
  %136 = vmatprep.subr.mxu0 0.0
  %137 = vmatpush1.msra.mxu0 0.0
  %138 = vmatprep.subr.mxu0 0.0
  %139 = vmatpush1.msra.mxu0 0.0
  %140 = vmatprep.subr.mxu0 0.0
  %141 = vmatpush1.msra.mxu0 0.0
  %142 = vmatprep.subr.mxu0 0.0
  %143 = vmatpush1.msra.mxu0 0.0
  %144 = vmatprep.subr.mxu0 0.0
  %145 = vmatpush1.msra.mxu0 0.0
  %146 = vmatprep.subr.mxu0 0.0
  %147 = vmatpush1.msra.mxu0 0.0
  %148 = vmatprep.subr.mxu0 0.0
  %149 = vmatpush1.msra.mxu0 0.0
  %150 = vmatprep.subr.mxu0 0.0
  %151 = vmatpush1.msra.mxu0 0.0
  %152 = vmatprep.subr.mxu0 0.0
  %153 = vmatpush1.msra.mxu0 0.0
  %154 = vmatprep.subr.mxu0 0.0
  %155 = vmatpush1.msra.mxu0 0.0
  %156 = vmatprep.subr.mxu0 0.0
  %157 = vmatpush1.msra.mxu0 0.0
  %158 = vmatprep.subr.mxu0 0.0
  %159 = vmatpush1.msra.mxu0 0.0
  %160 = vmatprep.subr.mxu0 0.0
  %161 = vmatpush1.msra.mxu0 0.0
  %162 = vmatprep.subr.mxu0 0.0
  %163 = vmatpush1.msra.mxu0 0.0
  %164 = vmatprep.subr.mxu0 0.0
  %165 = vmatpush1.msra.mxu0 0.0
  %166 = vmatprep.subr.mxu0 0.0
  %167 = vmatpush1.msra.mxu0 0.0
  %168 = vmatprep.subr.mxu0 0.0
  %169 = vmatpush1.msra.mxu0 0.0
  %170 = vmatprep.subr.mxu0 0.0
  %171 = vmatpush1.msra.mxu0 0.0
  %172 = vmatprep.subr.mxu0 0.0
  %173 = vmatpush1.msra.mxu0 0.0
  %174 = vmatprep.subr.mxu0 0.0
  %175 = vmatpush1.msra.mxu0 0.0
  %176 = vmatprep.subr.mxu0 0.0
  %177 = vmatpush1.msra.mxu0 0.0
  %178 = vmatprep.subr.mxu0 0.0
  %179 = vmatpush1.msra.mxu0 0.0
  %180 = vmatprep.subr.mxu0 0.0
  %181 = vmatpush1.msra.mxu0 0.0
  %182 = vmatprep.subr.mxu0 0.0
  %183 = vmatpush1.msra.mxu0 0.0
  %184 = vmatprep.subr.mxu0 0.0
  %185 = vmatpush1.msra.mxu0 0.0
  %186 = vmatprep.mubr.f32.mxu0 0.0
  %187 = vmatmul.mubr.f32.gmra.mrb[0].mxu0 %v49
  %v188 = vpop.f32.mrb[0].mxu0
  %v189 = vadd.f32 %v45, %v188
  %v190 = vpop.f32.mrb[0].mxu0
  %v191 = vadd.f32 %v45, %v190
  %192 = vdwg.mxu0
  %v193 = vmax.f32 %v118, 0.0
  %v194 = vmax.f32 %v120, 0.0
  %v195 = vmax.f32 %v189, 0.0
  %v196 = vmax.f32 %v191, 0.0
  %197 = vrot.lane.b32.xlu0 %v193, 17
  %v198 = vpop.permute.xlu0 %197
  %199 = vrot.lane.b32.xlu0 %v194, 17
  %v200 = vpop.permute.xlu0 %199
  %201 = vrot.lane.b32.xlu0 %v195, 17
  %v202 = vpop.permute.xlu0 %201
  %203 = vrot.lane.b32.xlu0 %v196, 17
  %v204 = vpop.permute.xlu0 %203
  %v205 = vlaneseq
  %v206 = vand.u32 %v205, 127
  %vm207 = vcmp.lt.s32.totalorder %v206, 17
  %v208 = vsel %vm207, %v202, %v204
  %v209 = vsel %vm207, %v200, %v202
  %v210 = vsel %vm207, %v198, %v200
  %v211 = vsel %vm207, %v204, %v198
  %v212 = vld [vmem:[%s1] ss:$8 sm:$0xf]
  %v214 = vlaneseq
  %v215 = vshrl.u32 %v214, 7
  %v216 = vsub.s32 0, %v215
  %v217 = vrot.slane %v212, %v216
  %v218 = vlaneseq
  %v219 = vshrl.u32 %v218, 7
  %v220 = vsub.s32 1, %v219
  %v221 = vrot.slane %v212, %v220
  %v222 = vlaneseq
  %v223 = vshrl.u32 %v222, 7
  %v224 = vsub.s32 2, %v223
  %v225 = vrot.slane %v212, %v224
  %v226 = vlaneseq
  %v227 = vshrl.u32 %v226, 7
  %v228 = vsub.s32 3, %v227
  %v229 = vrot.slane %v212, %v228
  %v234 = vmul.f32 %v211, %v217
  %v235 = vmul.f32 %v210, %v221
  %v236 = vmul.f32 %v209, %v225
  %v237 = vmul.f32 %v208, %v229
  %238 = vst [vmem:[#allocation2] sm:$0xff] %v234
  %239 = vst [vmem:[#allocation2 + $0x8] sm:$0xff] %v235
  %240 = vst [vmem:[#allocation2 + $0x10] sm:$0xff] %v236
  %241 = vst [vmem:[#allocation2 + $0x18] sm:$0xff] %v237
  %242 = vrot.lane.b32.xlu0 %v193, 16
  %v243 = vpop.permute.xlu0 %242
  %244 = vrot.lane.b32.xlu0 %v194, 16
  %v245 = vpop.permute.xlu0 %244
  %246 = vrot.lane.b32.xlu0 %v195, 16
  %v247 = vpop.permute.xlu0 %246
  %248 = vrot.lane.b32.xlu0 %v196, 16
  %v249 = vpop.permute.xlu0 %248
  %vm250 = vcmp.lt.s32.totalorder %v206, 16
  %v251 = vsel %vm250, %v247, %v249
  %v252 = vsel %vm250, %v245, %v247
  %v253 = vsel %vm250, %v243, %v245
  %v254 = vsel %vm250, %v249, %v243
  %s255 = scalar_lea.vmem %s1, 1
  %v256 = vld [vmem:[%s255] ss:$8 sm:$0xf]
  %v258 = vlaneseq
  %v259 = vshrl.u32 %v258, 7
  %v260 = vsub.s32 0, %v259
  %v261 = vrot.slane %v256, %v260
  %v262 = vlaneseq
  %v263 = vshrl.u32 %v262, 7
  %v264 = vsub.s32 1, %v263
  %v265 = vrot.slane %v256, %v264
  %v266 = vlaneseq
  %v267 = vshrl.u32 %v266, 7
  %v268 = vsub.s32 2, %v267
  %v269 = vrot.slane %v256, %v268
  %v270 = vlaneseq
  %v271 = vshrl.u32 %v270, 7
  %v272 = vsub.s32 3, %v271
  %v273 = vrot.slane %v256, %v272
  %v278 = vmul.f32 %v254, %v261
  %v279 = vmul.f32 %v253, %v265
  %v280 = vmul.f32 %v252, %v269
  %v281 = vmul.f32 %v251, %v273
  %282 = vst [vmem:[#allocation2 + $0x20] sm:$0xff] %v278
  %283 = vst [vmem:[#allocation2 + $0x28] sm:$0xff] %v279
  %284 = vst [vmem:[#allocation2 + $0x30] sm:$0xff] %v280
  %285 = vst [vmem:[#allocation2 + $0x38] sm:$0xff] %v281
  %286 = vrot.lane.b32.xlu0 %v193, 15
  %v287 = vpop.permute.xlu0 %286
  %288 = vrot.lane.b32.xlu0 %v194, 15
  %v289 = vpop.permute.xlu0 %288
  %290 = vrot.lane.b32.xlu0 %v195, 15
  %v291 = vpop.permute.xlu0 %290
  %292 = vrot.lane.b32.xlu0 %v196, 15
  %v293 = vpop.permute.xlu0 %292
  %vm294 = vcmp.lt.s32.totalorder %v206, 15
  %v295 = vsel %vm294, %v291, %v293
  %v296 = vsel %vm294, %v289, %v291
  %v297 = vsel %vm294, %v287, %v289
  %v298 = vsel %vm294, %v293, %v287
  %s299 = scalar_lea.vmem %s1, 2
  %v300 = vld [vmem:[%s299] ss:$8 sm:$0xf]
  %v302 = vlaneseq
  %v303 = vshrl.u32 %v302, 7
  %v304 = vsub.s32 0, %v303
  %v305 = vrot.slane %v300, %v304
  %v306 = vlaneseq
  %v307 = vshrl.u32 %v306, 7
  %v308 = vsub.s32 1, %v307
  %v309 = vrot.slane %v300, %v308
  %v310 = vlaneseq
  %v311 = vshrl.u32 %v310, 7
  %v312 = vsub.s32 2, %v311
  %v313 = vrot.slane %v300, %v312
  %v314 = vlaneseq
  %v315 = vshrl.u32 %v314, 7
  %v316 = vsub.s32 3, %v315
  %v317 = vrot.slane %v300, %v316
  %v322 = vmul.f32 %v298, %v305
  %v323 = vmul.f32 %v297, %v309
  %v324 = vmul.f32 %v296, %v313
  %v325 = vmul.f32 %v295, %v317
  %326 = vst [vmem:[#allocation2 + $0x40] sm:$0xff] %v322
  %327 = vst [vmem:[#allocation2 + $0x48] sm:$0xff] %v323
  %328 = vst [vmem:[#allocation2 + $0x50] sm:$0xff] %v324
  %329 = vst [vmem:[#allocation2 + $0x58] sm:$0xff] %v325
  %330 = vrot.lane.b32.xlu0 %v193, 1
  %v331 = vpop.permute.xlu0 %330
  %332 = vrot.lane.b32.xlu0 %v194, 1
  %v333 = vpop.permute.xlu0 %332
  %334 = vrot.lane.b32.xlu0 %v195, 1
  %v335 = vpop.permute.xlu0 %334
  %336 = vrot.lane.b32.xlu0 %v196, 1
  %v337 = vpop.permute.xlu0 %336
  %vm338 = vcmp.lt.s32.totalorder %v206, 1
  %v339 = vsel %vm338, %v335, %v337
  %v340 = vsel %vm338, %v333, %v335
  %v341 = vsel %vm338, %v331, %v333
  %v342 = vsel %vm338, %v337, %v331
  %s343 = scalar_lea.vmem %s1, 3
  %v344 = vld [vmem:[%s343] ss:$8 sm:$0xf]
  %v346 = vlaneseq
  %v347 = vshrl.u32 %v346, 7
  %v348 = vsub.s32 0, %v347
  %v349 = vrot.slane %v344, %v348
  %v350 = vlaneseq
  %v351 = vshrl.u32 %v350, 7
  %v352 = vsub.s32 1, %v351
  %v353 = vrot.slane %v344, %v352
  %v354 = vlaneseq
  %v355 = vshrl.u32 %v354, 7
  %v356 = vsub.s32 2, %v355
  %v357 = vrot.slane %v344, %v356
  %v358 = vlaneseq
  %v359 = vshrl.u32 %v358, 7
  %v360 = vsub.s32 3, %v359
  %v361 = vrot.slane %v344, %v360
  %v366 = vmul.f32 %v342, %v349
  %v367 = vmul.f32 %v341, %v353
  %v368 = vmul.f32 %v340, %v357
  %v369 = vmul.f32 %v339, %v361
  %370 = vst [vmem:[#allocation2 + $0x60] sm:$0xff] %v366
  %371 = vst [vmem:[#allocation2 + $0x68] sm:$0xff] %v367
  %372 = vst [vmem:[#allocation2 + $0x70] sm:$0xff] %v368
  %373 = vst [vmem:[#allocation2 + $0x78] sm:$0xff] %v369
  %374 = vst [vmem:[#allocation2 + $0x80] sm:$0xff] %v193
  %375 = vst [vmem:[#allocation2 + $0x88] sm:$0xff] %v194
  %376 = vst [vmem:[#allocation2 + $0x90] sm:$0xff] %v195
  %377 = vst [vmem:[#allocation2 + $0x98] sm:$0xff] %v196
  %378 = vrot.lane.b32.xlu0 %v193, 127
  %v379 = vpop.permute.xlu0 %378
  %380 = vrot.lane.b32.xlu0 %v194, 127
  %v381 = vpop.permute.xlu0 %380
  %382 = vrot.lane.b32.xlu0 %v195, 127
  %v383 = vpop.permute.xlu0 %382
  %384 = vrot.lane.b32.xlu0 %v196, 127
  %v385 = vpop.permute.xlu0 %384
  %vm386 = vcmp.lt.s32.totalorder %v206, 127
  %v387 = vsel %vm386, %v383, %v385
  %v388 = vsel %vm386, %v381, %v383
  %v389 = vsel %vm386, %v379, %v381
  %v390 = vsel %vm386, %v385, %v379
  %s391 = scalar_lea.vmem %s1, 5
  %v392 = vld [vmem:[%s391] ss:$8 sm:$0xf]
  %v394 = vlaneseq
  %v395 = vshrl.u32 %v394, 7
  %v396 = vsub.s32 0, %v395
  %v397 = vrot.slane %v392, %v396
  %v398 = vlaneseq
  %v399 = vshrl.u32 %v398, 7
  %v400 = vsub.s32 1, %v399
  %v401 = vrot.slane %v392, %v400
  %v402 = vlaneseq
  %v403 = vshrl.u32 %v402, 7
  %v404 = vsub.s32 2, %v403
  %v405 = vrot.slane %v392, %v404
  %v406 = vlaneseq
  %v407 = vshrl.u32 %v406, 7
  %v408 = vsub.s32 3, %v407
  %v409 = vrot.slane %v392, %v408
  %v414 = vmul.f32 %v389, %v397
  %v415 = vmul.f32 %v388, %v401
  %v416 = vmul.f32 %v387, %v405
  %v417 = vmul.f32 %v390, %v409
  %418 = vst [vmem:[#allocation2 + $0xa0] sm:$0xff] %v414
  %419 = vst [vmem:[#allocation2 + $0xa8] sm:$0xff] %v415
  %420 = vst [vmem:[#allocation2 + $0xb0] sm:$0xff] %v416
  %421 = vst [vmem:[#allocation2 + $0xb8] sm:$0xff] %v417
  %422 = vrot.lane.b32.xlu0 %v193, 113
  %v423 = vpop.permute.xlu0 %422
  %424 = vrot.lane.b32.xlu0 %v194, 113
  %v425 = vpop.permute.xlu0 %424
  %426 = vrot.lane.b32.xlu0 %v195, 113
  %v427 = vpop.permute.xlu0 %426
  %428 = vrot.lane.b32.xlu0 %v196, 113
  %v429 = vpop.permute.xlu0 %428
  %vm430 = vcmp.lt.s32.totalorder %v206, 113
  %v431 = vsel %vm430, %v427, %v429
  %v432 = vsel %vm430, %v425, %v427
  %v433 = vsel %vm430, %v423, %v425
  %v434 = vsel %vm430, %v429, %v423
  %s435 = scalar_lea.vmem %s1, 6
  %v436 = vld [vmem:[%s435] ss:$8 sm:$0xf]
  %v438 = vlaneseq
  %v439 = vshrl.u32 %v438, 7
  %v440 = vsub.s32 0, %v439
  %v441 = vrot.slane %v436, %v440
  %v442 = vlaneseq
  %v443 = vshrl.u32 %v442, 7
  %v444 = vsub.s32 1, %v443
  %v445 = vrot.slane %v436, %v444
  %v446 = vlaneseq
  %v447 = vshrl.u32 %v446, 7
  %v448 = vsub.s32 2, %v447
  %v449 = vrot.slane %v436, %v448
  %v450 = vlaneseq
  %v451 = vshrl.u32 %v450, 7
  %v452 = vsub.s32 3, %v451
  %v453 = vrot.slane %v436, %v452
  %v458 = vmul.f32 %v433, %v441
  %v459 = vmul.f32 %v432, %v445
  %v460 = vmul.f32 %v431, %v449
  %v461 = vmul.f32 %v434, %v453
  %462 = vst [vmem:[#allocation2 + $0xc0] sm:$0xff] %v458
  %463 = vst [vmem:[#allocation2 + $0xc8] sm:$0xff] %v459
  %464 = vst [vmem:[#allocation2 + $0xd0] sm:$0xff] %v460
  %465 = vst [vmem:[#allocation2 + $0xd8] sm:$0xff] %v461
  %466 = vrot.lane.b32.xlu0 %v193, 112
  %v467 = vpop.permute.xlu0 %466
  %468 = vrot.lane.b32.xlu0 %v194, 112
  %v469 = vpop.permute.xlu0 %468
  %470 = vrot.lane.b32.xlu0 %v195, 112
  %v471 = vpop.permute.xlu0 %470
  %472 = vrot.lane.b32.xlu0 %v196, 112
  %v473 = vpop.permute.xlu0 %472
  %vm474 = vcmp.lt.s32.totalorder %v206, 112
  %v475 = vsel %vm474, %v471, %v473
  %v476 = vsel %vm474, %v469, %v471
  %v477 = vsel %vm474, %v467, %v469
  %v478 = vsel %vm474, %v473, %v467
  %s479 = scalar_lea.vmem %s1, 7
  %v480 = vld [vmem:[%s479] ss:$8 sm:$0xf]
  %v482 = vlaneseq
  %v483 = vshrl.u32 %v482, 7
  %v484 = vsub.s32 0, %v483
  %v485 = vrot.slane %v480, %v484
  %v486 = vlaneseq
  %v487 = vshrl.u32 %v486, 7
  %v488 = vsub.s32 1, %v487
  %v489 = vrot.slane %v480, %v488
  %v490 = vlaneseq
  %v491 = vshrl.u32 %v490, 7
  %v492 = vsub.s32 2, %v491
  %v493 = vrot.slane %v480, %v492
  %v494 = vlaneseq
  %v495 = vshrl.u32 %v494, 7
  %v496 = vsub.s32 3, %v495
  %v497 = vrot.slane %v480, %v496
  %v502 = vmul.f32 %v477, %v485
  %v503 = vmul.f32 %v476, %v489
  %v504 = vmul.f32 %v475, %v493
  %v505 = vmul.f32 %v478, %v497
  %506 = vst [vmem:[#allocation2 + $0xe0] sm:$0xff] %v502
  %507 = vst [vmem:[#allocation2 + $0xe8] sm:$0xff] %v503
  %508 = vst [vmem:[#allocation2 + $0xf0] sm:$0xff] %v504
  %509 = vst [vmem:[#allocation2 + $0xf8] sm:$0xff] %v505
  %510 = vrot.lane.b32.xlu0 %v193, 111
  %v511 = vpop.permute.xlu0 %510
  %512 = vrot.lane.b32.xlu0 %v194, 111
  %v513 = vpop.permute.xlu0 %512
  %514 = vrot.lane.b32.xlu0 %v195, 111
  %v515 = vpop.permute.xlu0 %514
  %516 = vrot.lane.b32.xlu0 %v196, 111
  %v517 = vpop.permute.xlu0 %516
  %vm518 = vcmp.lt.s32.totalorder %v206, 111
  %v519 = vsel %vm518, %v515, %v517
  %v520 = vsel %vm518, %v513, %v515
  %v521 = vsel %vm518, %v511, %v513
  %v522 = vsel %vm518, %v517, %v511
  %s523 = scalar_lea.vmem %s1, 32
  %v524 = vld [vmem:[%s523] ss:$8 sm:$0xf]
  %v526 = vlaneseq
  %v527 = vshrl.u32 %v526, 7
  %v528 = vsub.s32 0, %v527
  %v529 = vrot.slane %v524, %v528
  %v530 = vlaneseq
  %v531 = vshrl.u32 %v530, 7
  %v532 = vsub.s32 1, %v531
  %v533 = vrot.slane %v524, %v532
  %v534 = vlaneseq
  %v535 = vshrl.u32 %v534, 7
  %v536 = vsub.s32 2, %v535
  %v537 = vrot.slane %v524, %v536
  %v538 = vlaneseq
  %v539 = vshrl.u32 %v538, 7
  %v540 = vsub.s32 3, %v539
  %v541 = vrot.slane %v524, %v540
  %v546 = vmul.f32 %v521, %v529
  %v547 = vmul.f32 %v520, %v533
  %v548 = vmul.f32 %v519, %v537
  %v549 = vmul.f32 %v522, %v541
  %550 = vst [vmem:[#allocation2 + $0x100] sm:$0xff] %v546
  %551 = vst [vmem:[#allocation2 + $0x108] sm:$0xff] %v547
  %552 = vst [vmem:[#allocation2 + $0x110] sm:$0xff] %v548
  %553 = vst [vmem:[#allocation2 + $0x118] sm:$0xff] %v549
  %v554 = vld [vmem:[%s4] sm:$0xff]
  %v555 = vld [vmem:[#allocation2] sm:$0xff]
  %v556 = vld [vmem:[#allocation2 + $0x8] sm:$0xff]
  %v557 = vld [vmem:[#allocation2 + $0x10] sm:$0xff]
  %v558 = vld [vmem:[#allocation2 + $0x18] sm:$0xff]
  %v559 = vld [vmem:[#allocation2 + $0x20] sm:$0xff]
  %v560 = vld [vmem:[#allocation2 + $0x28] sm:$0xff]
  %v561 = vld [vmem:[#allocation2 + $0x30] sm:$0xff]
  %v562 = vld [vmem:[#allocation2 + $0x38] sm:$0xff]
  %v563 = vld [vmem:[#allocation2 + $0x40] sm:$0xff]
  %v564 = vld [vmem:[#allocation2 + $0x48] sm:$0xff]
  %v565 = vld [vmem:[#allocation2 + $0x50] sm:$0xff]
  %v566 = vld [vmem:[#allocation2 + $0x58] sm:$0xff]
  %v567 = vld [vmem:[#allocation2 + $0x60] sm:$0xff]
  %v568 = vld [vmem:[#allocation2 + $0x68] sm:$0xff]
  %v569 = vld [vmem:[#allocation2 + $0x70] sm:$0xff]
  %v570 = vld [vmem:[#allocation2 + $0x78] sm:$0xff]
  %v571 = vld [vmem:[#allocation2 + $0x80] sm:$0xff]
  %v572 = vld [vmem:[#allocation2 + $0x88] sm:$0xff]
  %v573 = vld [vmem:[#allocation2 + $0x90] sm:$0xff]
  %v574 = vld [vmem:[#allocation2 + $0x98] sm:$0xff]
  %v575 = vld [vmem:[#allocation2 + $0xa0] sm:$0xff]
  %v576 = vld [vmem:[#allocation2 + $0xa8] sm:$0xff]
  %v577 = vld [vmem:[#allocation2 + $0xb0] sm:$0xff]
  %v578 = vld [vmem:[#allocation2 + $0xb8] sm:$0xff]
  %v579 = vld [vmem:[#allocation2 + $0xc0] sm:$0xff]
  %v580 = vld [vmem:[#allocation2 + $0xc8] sm:$0xff]
  %v581 = vld [vmem:[#allocation2 + $0xd0] sm:$0xff]
  %v582 = vld [vmem:[#allocation2 + $0xd8] sm:$0xff]
  %v583 = vld [vmem:[#allocation2 + $0xe0] sm:$0xff]
  %v584 = vld [vmem:[#allocation2 + $0xe8] sm:$0xff]
  %v585 = vld [vmem:[#allocation2 + $0xf0] sm:$0xff]
  %v586 = vld [vmem:[#allocation2 + $0xf8] sm:$0xff]
  %v587 = vld [vmem:[#allocation2 + $0x100] sm:$0xff]
  %v588 = vld [vmem:[#allocation2 + $0x108] sm:$0xff]
  %v589 = vld [vmem:[#allocation2 + $0x110] sm:$0xff]
  %v590 = vld [vmem:[#allocation2 + $0x118] sm:$0xff]
  %v591 = vld [vmem:[%s5] sm:$0xff]
  %593 = vset.pattern.permute.xlu0 0
  %594 = vperm.xlu0 %593, %v591
  %v595 = vpop.permute.xlu0 %594
  %vm597 = vcmask 588800
  %v599 = vsel %vm597, %v554, 0
  %601 = vmatprep.subr.mxu0 %v556
  %602 = vmatpush1.msra.mxu0 %v555
  %603 = vmatprep.subr.mxu0 %v560
  %604 = vmatpush1.msra.mxu0 %v559
  %605 = vmatprep.subr.mxu0 %v564
  %606 = vmatpush1.msra.mxu0 %v563
  %607 = vmatprep.subr.mxu0 %v568
  %608 = vmatpush1.msra.mxu0 %v567
  %609 = vmatprep.subr.mxu0 %v572
  %610 = vmatpush1.msra.mxu0 %v571
  %611 = vmatprep.subr.mxu0 %v576
  %612 = vmatpush1.msra.mxu0 %v575
  %613 = vmatprep.subr.mxu0 %v580
  %614 = vmatpush1.msra.mxu0 %v579
  %615 = vmatprep.subr.mxu0 %v584
  %616 = vmatpush1.msra.mxu0 %v583
  %617 = vmatprep.subr.mxu0 %v588
  %618 = vmatpush1.msra.mxu0 %v587
  %619 = vmatprep.subr.mxu0 0.0
  %620 = vmatpush1.msra.mxu0 0.0
  %621 = vmatprep.subr.mxu0 0.0
  %622 = vmatpush1.msra.mxu0 0.0
  %623 = vmatprep.subr.mxu0 0.0
  %624 = vmatpush1.msra.mxu0 0.0
  %625 = vmatprep.subr.mxu0 0.0
  %626 = vmatpush1.msra.mxu0 0.0
  %627 = vmatprep.subr.mxu0 0.0
  %628 = vmatpush1.msra.mxu0 0.0
  %629 = vmatprep.subr.mxu0 0.0
  %630 = vmatpush1.msra.mxu0 0.0
  %631 = vmatprep.subr.mxu0 0.0
  %632 = vmatpush1.msra.mxu0 0.0
  %633 = vmatprep.subr.mxu0 0.0
  %634 = vmatpush1.msra.mxu0 0.0
  %635 = vmatprep.subr.mxu0 0.0
  %636 = vmatpush1.msra.mxu0 0.0
  %637 = vmatprep.subr.mxu0 0.0
  %638 = vmatpush1.msra.mxu0 0.0
  %639 = vmatprep.subr.mxu0 0.0
  %640 = vmatpush1.msra.mxu0 0.0
  %641 = vmatprep.subr.mxu0 0.0
  %642 = vmatpush1.msra.mxu0 0.0
  %643 = vmatprep.subr.mxu0 0.0
  %644 = vmatpush1.msra.mxu0 0.0
  %645 = vmatprep.subr.mxu0 0.0
  %646 = vmatpush1.msra.mxu0 0.0
  %647 = vmatprep.subr.mxu0 0.0
  %648 = vmatpush1.msra.mxu0 0.0
  %649 = vmatprep.subr.mxu0 0.0
  %650 = vmatpush1.msra.mxu0 0.0
  %651 = vmatprep.subr.mxu0 0.0
  %652 = vmatpush1.msra.mxu0 0.0
  %653 = vmatprep.subr.mxu0 0.0
  %654 = vmatpush1.msra.mxu0 0.0
  %655 = vmatprep.subr.mxu0 0.0
  %656 = vmatpush1.msra.mxu0 0.0
  %657 = vmatprep.subr.mxu0 0.0
  %658 = vmatpush1.msra.mxu0 0.0
  %659 = vmatprep.subr.mxu0 0.0
  %660 = vmatpush1.msra.mxu0 0.0
  %661 = vmatprep.subr.mxu0 0.0
  %662 = vmatpush1.msra.mxu0 0.0
  %663 = vmatprep.subr.mxu0 0.0
  %664 = vmatpush1.msra.mxu0 0.0
  %665 = vmatprep.mubr.f32.mxu0 0.0
  %666 = vmatmul.mubr.f32.gmra.mrb[0].mxu0 %v599
  %v667 = vpop.f32.mrb[0].mxu0
  %v668 = vadd.f32 %v595, %v667
  %v669 = vpop.f32.mrb[0].mxu0
  %v670 = vadd.f32 %v595, %v669
  %671 = vdwg.mxu0
  %672 = vmatprep.subr.mxu0 %v558
  %673 = vmatpush1.msra.mxu0 %v557
  %674 = vmatprep.subr.mxu0 %v562
  %675 = vmatpush1.msra.mxu0 %v561
  %676 = vmatprep.subr.mxu0 %v566
  %677 = vmatpush1.msra.mxu0 %v565
  %678 = vmatprep.subr.mxu0 %v570
  %679 = vmatpush1.msra.mxu0 %v569
  %680 = vmatprep.subr.mxu0 %v574
  %681 = vmatpush1.msra.mxu0 %v573
  %682 = vmatprep.subr.mxu0 %v578
  %683 = vmatpush1.msra.mxu0 %v577
  %684 = vmatprep.subr.mxu0 %v582
  %685 = vmatpush1.msra.mxu0 %v581
  %686 = vmatprep.subr.mxu0 %v586
  %687 = vmatpush1.msra.mxu0 %v585
  %688 = vmatprep.subr.mxu0 %v590
  %689 = vmatpush1.msra.mxu0 %v589
  %690 = vmatprep.subr.mxu0 0.0
  %691 = vmatpush1.msra.mxu0 0.0
  %692 = vmatprep.subr.mxu0 0.0
  %693 = vmatpush1.msra.mxu0 0.0
  %694 = vmatprep.subr.mxu0 0.0
  %695 = vmatpush1.msra.mxu0 0.0
  %696 = vmatprep.subr.mxu0 0.0
  %697 = vmatpush1.msra.mxu0 0.0
  %698 = vmatprep.subr.mxu0 0.0
  %699 = vmatpush1.msra.mxu0 0.0
  %700 = vmatprep.subr.mxu0 0.0
  %701 = vmatpush1.msra.mxu0 0.0
  %702 = vmatprep.subr.mxu0 0.0
  %703 = vmatpush1.msra.mxu0 0.0
  %704 = vmatprep.subr.mxu0 0.0
  %705 = vmatpush1.msra.mxu0 0.0
  %706 = vmatprep.subr.mxu0 0.0
  %707 = vmatpush1.msra.mxu0 0.0
  %708 = vmatprep.subr.mxu0 0.0
  %709 = vmatpush1.msra.mxu0 0.0
  %710 = vmatprep.subr.mxu0 0.0
  %711 = vmatpush1.msra.mxu0 0.0
  %712 = vmatprep.subr.mxu0 0.0
  %713 = vmatpush1.msra.mxu0 0.0
  %714 = vmatprep.subr.mxu0 0.0
  %715 = vmatpush1.msra.mxu0 0.0
  %716 = vmatprep.subr.mxu0 0.0
  %717 = vmatpush1.msra.mxu0 0.0
  %718 = vmatprep.subr.mxu0 0.0
  %719 = vmatpush1.msra.mxu0 0.0
  %720 = vmatprep.subr.mxu0 0.0
  %721 = vmatpush1.msra.mxu0 0.0
  %722 = vmatprep.subr.mxu0 0.0
  %723 = vmatpush1.msra.mxu0 0.0
  %724 = vmatprep.subr.mxu0 0.0
  %725 = vmatpush1.msra.mxu0 0.0
  %726 = vmatprep.subr.mxu0 0.0
  %727 = vmatpush1.msra.mxu0 0.0
  %728 = vmatprep.subr.mxu0 0.0
  %729 = vmatpush1.msra.mxu0 0.0
  %730 = vmatprep.subr.mxu0 0.0
  %731 = vmatpush1.msra.mxu0 0.0
  %732 = vmatprep.subr.mxu0 0.0
  %733 = vmatpush1.msra.mxu0 0.0
  %734 = vmatprep.subr.mxu0 0.0
  %735 = vmatpush1.msra.mxu0 0.0
  %736 = vmatprep.mubr.f32.mxu0 0.0
  %737 = vmatmul.mubr.f32.gmra.mrb[0].mxu0 %v599
  %v738 = vpop.f32.mrb[0].mxu0
  %v739 = vadd.f32 %v595, %v738
  %v740 = vpop.f32.mrb[0].mxu0
  %v741 = vadd.f32 %v595, %v740
  %742 = vdwg.mxu0
  %v743 = vmax.f32 %v668, 0.0
  %v744 = vmax.f32 %v670, 0.0
  %v745 = vmax.f32 %v739, 0.0
  %v746 = vmax.f32 %v741, 0.0
  %v747 = vld [vmem:[%s6] sm:$0xff]
  %v748 = vld [vmem:[%s6 + $0x8] sm:$0xff]
  %v749 = vld [vmem:[%s6 + $0x10] sm:$0xff]
  %v750 = vld [vmem:[%s6 + $0x18] sm:$0xff]
  %v751 = vld [vmem:[%s7] sm:$0xff]
  %v752 = vld [vmem:[%s7 + $0x8] sm:$0xff]
  %v753 = vld [vmem:[%s7 + $0x10] sm:$0xff]
  %v754 = vld [vmem:[%s7 + $0x18] sm:$0xff]
  %v756 = vsel %vm47, %v751, 0
  %v759 = vsel %vm47, %v752, 0
  %v762 = vsel %vm47, %v753, 0
  %v765 = vsel %vm47, %v754, 0
  %767 = vmatprep.subr.mxu0 %v33
  %768 = vmatpush1.msra.mxu0 %v32
  %769 = vmatprep.subr.mxu0 %v37
  %770 = vmatpush1.msra.mxu0 %v36
  %771 = vmatprep.subr.mxu0 0.0
  %772 = vmatpush1.msra.mxu0 0.0
  %773 = vmatprep.subr.mxu0 0.0
  %774 = vmatpush1.msra.mxu0 0.0
  %775 = vmatprep.subr.mxu0 0.0
  %776 = vmatpush1.msra.mxu0 0.0
  %777 = vmatprep.subr.mxu0 0.0
  %778 = vmatpush1.msra.mxu0 0.0
  %779 = vmatprep.subr.mxu0 0.0
  %780 = vmatpush1.msra.mxu0 0.0
  %781 = vmatprep.subr.mxu0 0.0
  %782 = vmatpush1.msra.mxu0 0.0
  %783 = vmatprep.subr.mxu0 0.0
  %784 = vmatpush1.msra.mxu0 0.0
  %785 = vmatprep.subr.mxu0 0.0
  %786 = vmatpush1.msra.mxu0 0.0
  %787 = vmatprep.subr.mxu0 0.0
  %788 = vmatpush1.msra.mxu0 0.0
  %789 = vmatprep.subr.mxu0 0.0
  %790 = vmatpush1.msra.mxu0 0.0
  %791 = vmatprep.subr.mxu0 0.0
  %792 = vmatpush1.msra.mxu0 0.0
  %793 = vmatprep.subr.mxu0 0.0
  %794 = vmatpush1.msra.mxu0 0.0
  %795 = vmatprep.subr.mxu0 0.0
  %796 = vmatpush1.msra.mxu0 0.0
  %797 = vmatprep.subr.mxu0 0.0
  %798 = vmatpush1.msra.mxu0 0.0
  %799 = vmatprep.subr.mxu0 0.0
  %800 = vmatpush1.msra.mxu0 0.0
  %801 = vmatprep.subr.mxu0 0.0
  %802 = vmatpush1.msra.mxu0 0.0
  %803 = vmatprep.subr.mxu0 0.0
  %804 = vmatpush1.msra.mxu0 0.0
  %805 = vmatprep.subr.mxu0 0.0
  %806 = vmatpush1.msra.mxu0 0.0
  %807 = vmatprep.subr.mxu0 0.0
  %808 = vmatpush1.msra.mxu0 0.0
  %809 = vmatprep.subr.mxu0 0.0
  %810 = vmatpush1.msra.mxu0 0.0
  %811 = vmatprep.subr.mxu0 0.0
  %812 = vmatpush1.msra.mxu0 0.0
  %813 = vmatprep.subr.mxu0 0.0
  %814 = vmatpush1.msra.mxu0 0.0
  %815 = vmatprep.subr.mxu0 0.0
  %816 = vmatpush1.msra.mxu0 0.0
  %817 = vmatprep.subr.mxu0 0.0
  %818 = vmatpush1.msra.mxu0 0.0
  %819 = vmatprep.subr.mxu0 0.0
  %820 = vmatpush1.msra.mxu0 0.0
  %821 = vmatprep.subr.mxu0 0.0
  %822 = vmatpush1.msra.mxu0 0.0
  %823 = vmatprep.subr.mxu0 0.0
  %824 = vmatpush1.msra.mxu0 0.0
  %825 = vmatprep.subr.mxu0 0.0
  %826 = vmatpush1.msra.mxu0 0.0
  %827 = vmatprep.subr.mxu0 0.0
  %828 = vmatpush1.msra.mxu0 0.0
  %829 = vmatprep.subr.mxu0 0.0
  %830 = vmatpush1.msra.mxu0 0.0
  %831 = vmatprep.mubr.f32.mxu0 0.0
  %832 = vmatmul.mubr.f32.gmra.mrb[0].mxu0 %v756
  %v833 = vpop.f32.mrb[0].mxu0
  %v834 = vadd.f32 0.0, %v833
  %v835 = vpop.f32.mrb[0].mxu0
  %v836 = vadd.f32 0.0, %v835
  %837 = vmatprep.mubr.f32.mxu0 0.0
  %838 = vmatmul.mubr.f32.gmra.mrb[0].mxu0 %v759
  %v839 = vpop.f32.mrb[0].mxu0
  %v840 = vadd.f32 0.0, %v839
  %v841 = vpop.f32.mrb[0].mxu0
  %v842 = vadd.f32 0.0, %v841
  %843 = vmatprep.mubr.f32.mxu0 0.0
  %844 = vmatmul.mubr.f32.gmra.mrb[0].mxu0 %v762
  %v845 = vpop.f32.mrb[0].mxu0
  %v846 = vadd.f32 0.0, %v845
  %v847 = vpop.f32.mrb[0].mxu0
  %v848 = vadd.f32 0.0, %v847
  %849 = vmatprep.mubr.f32.mxu0 0.0
  %850 = vmatmul.mubr.f32.gmra.mrb[0].mxu0 %v765
  %v851 = vpop.f32.mrb[0].mxu0
  %v852 = vadd.f32 0.0, %v851
  %v853 = vpop.f32.mrb[0].mxu0
  %v854 = vadd.f32 0.0, %v853
  %855 = vdwg.mxu0
  %856 = vmatprep.subr.mxu0 %v35
  %857 = vmatpush1.msra.mxu0 %v34
  %858 = vmatprep.subr.mxu0 %v39
  %859 = vmatpush1.msra.mxu0 %v38
  %860 = vmatprep.subr.mxu0 0.0
  %861 = vmatpush1.msra.mxu0 0.0
  %862 = vmatprep.subr.mxu0 0.0
  %863 = vmatpush1.msra.mxu0 0.0
  %864 = vmatprep.subr.mxu0 0.0
  %865 = vmatpush1.msra.mxu0 0.0
  %866 = vmatprep.subr.mxu0 0.0
  %867 = vmatpush1.msra.mxu0 0.0
  %868 = vmatprep.subr.mxu0 0.0
  %869 = vmatpush1.msra.mxu0 0.0
  %870 = vmatprep.subr.mxu0 0.0
  %871 = vmatpush1.msra.mxu0 0.0
  %872 = vmatprep.subr.mxu0 0.0
  %873 = vmatpush1.msra.mxu0 0.0
  %874 = vmatprep.subr.mxu0 0.0
  %875 = vmatpush1.msra.mxu0 0.0
  %876 = vmatprep.subr.mxu0 0.0
  %877 = vmatpush1.msra.mxu0 0.0
  %878 = vmatprep.subr.mxu0 0.0
  %879 = vmatpush1.msra.mxu0 0.0
  %880 = vmatprep.subr.mxu0 0.0
  %881 = vmatpush1.msra.mxu0 0.0
  %882 = vmatprep.subr.mxu0 0.0
  %883 = vmatpush1.msra.mxu0 0.0
  %884 = vmatprep.subr.mxu0 0.0
  %885 = vmatpush1.msra.mxu0 0.0
  %886 = vmatprep.subr.mxu0 0.0
  %887 = vmatpush1.msra.mxu0 0.0
  %888 = vmatprep.subr.mxu0 0.0
  %889 = vmatpush1.msra.mxu0 0.0
  %890 = vmatprep.subr.mxu0 0.0
  %891 = vmatpush1.msra.mxu0 0.0
  %892 = vmatprep.subr.mxu0 0.0
  %893 = vmatpush1.msra.mxu0 0.0
  %894 = vmatprep.subr.mxu0 0.0
  %895 = vmatpush1.msra.mxu0 0.0
  %896 = vmatprep.subr.mxu0 0.0
  %897 = vmatpush1.msra.mxu0 0.0
  %898 = vmatprep.subr.mxu0 0.0
  %899 = vmatpush1.msra.mxu0 0.0
  %900 = vmatprep.subr.mxu0 0.0
  %901 = vmatpush1.msra.mxu0 0.0
  %902 = vmatprep.subr.mxu0 0.0
  %903 = vmatpush1.msra.mxu0 0.0
  %904 = vmatprep.subr.mxu0 0.0
  %905 = vmatpush1.msra.mxu0 0.0
  %906 = vmatprep.subr.mxu0 0.0
  %907 = vmatpush1.msra.mxu0 0.0
  %908 = vmatprep.subr.mxu0 0.0
  %909 = vmatpush1.msra.mxu0 0.0
  %910 = vmatprep.subr.mxu0 0.0
  %911 = vmatpush1.msra.mxu0 0.0
  %912 = vmatprep.subr.mxu0 0.0
  %913 = vmatpush1.msra.mxu0 0.0
  %914 = vmatprep.subr.mxu0 0.0
  %915 = vmatpush1.msra.mxu0 0.0
  %916 = vmatprep.subr.mxu0 0.0
  %917 = vmatpush1.msra.mxu0 0.0
  %918 = vmatprep.subr.mxu0 0.0
  %919 = vmatpush1.msra.mxu0 0.0
  %920 = vmatprep.mubr.f32.mxu0 0.0
  %921 = vmatmul.mubr.f32.gmra.mrb[0].mxu0 %v756
  %v922 = vpop.f32.mrb[0].mxu0
  %v923 = vadd.f32 0.0, %v922
  %v924 = vpop.f32.mrb[0].mxu0
  %v925 = vadd.f32 0.0, %v924
  %926 = vmatprep.mubr.f32.mxu0 0.0
  %927 = vmatmul.mubr.f32.gmra.mrb[0].mxu0 %v759
  %v928 = vpop.f32.mrb[0].mxu0
  %v929 = vadd.f32 0.0, %v928
  %v930 = vpop.f32.mrb[0].mxu0
  %v931 = vadd.f32 0.0, %v930
  %932 = vmatprep.mubr.f32.mxu0 0.0
  %933 = vmatmul.mubr.f32.gmra.mrb[0].mxu0 %v762
  %v934 = vpop.f32.mrb[0].mxu0
  %v935 = vadd.f32 0.0, %v934
  %v936 = vpop.f32.mrb[0].mxu0
  %v937 = vadd.f32 0.0, %v936
  %938 = vmatprep.mubr.f32.mxu0 0.0
  %939 = vmatmul.mubr.f32.gmra.mrb[0].mxu0 %v765
  %v940 = vpop.f32.mrb[0].mxu0
  %v941 = vadd.f32 0.0, %v940
  %v942 = vpop.f32.mrb[0].mxu0
  %v943 = vadd.f32 0.0, %v942
  %944 = vdwg.mxu0
  %vm945 = vcmask 64512
  %v947 = vsel %vm945, %v747, 0
  %v950 = vsel %vm945, %v748, 0
  %v953 = vsel %vm945, %v749, 0
  %v956 = vsel %vm945, %v750, 0
  %958 = vmatprep.subr.mxu0 %v744
  %959 = vmatpush1.msra.mxu0 %v743
  %960 = vmatprep.subr.mxu0 0.0
  %961 = vmatpush1.msra.mxu0 0.0
  %962 = vmatprep.subr.mxu0 0.0
  %963 = vmatpush1.msra.mxu0 0.0
  %964 = vmatprep.subr.mxu0 0.0
  %965 = vmatpush1.msra.mxu0 0.0
  %966 = vmatprep.subr.mxu0 0.0
  %967 = vmatpush1.msra.mxu0 0.0
  %968 = vmatprep.subr.mxu0 0.0
  %969 = vmatpush1.msra.mxu0 0.0
  %970 = vmatprep.subr.mxu0 0.0
  %971 = vmatpush1.msra.mxu0 0.0
  %972 = vmatprep.subr.mxu0 0.0
  %973 = vmatpush1.msra.mxu0 0.0
  %974 = vmatprep.subr.mxu0 0.0
  %975 = vmatpush1.msra.mxu0 0.0
  %976 = vmatprep.subr.mxu0 0.0
  %977 = vmatpush1.msra.mxu0 0.0
  %978 = vmatprep.subr.mxu0 0.0
  %979 = vmatpush1.msra.mxu0 0.0
  %980 = vmatprep.subr.mxu0 0.0
  %981 = vmatpush1.msra.mxu0 0.0
  %982 = vmatprep.subr.mxu0 0.0
  %983 = vmatpush1.msra.mxu0 0.0
  %984 = vmatprep.subr.mxu0 0.0
  %985 = vmatpush1.msra.mxu0 0.0
  %986 = vmatprep.subr.mxu0 0.0
  %987 = vmatpush1.msra.mxu0 0.0
  %988 = vmatprep.subr.mxu0 0.0
  %989 = vmatpush1.msra.mxu0 0.0
  %990 = vmatprep.subr.mxu0 0.0
  %991 = vmatpush1.msra.mxu0 0.0
  %992 = vmatprep.subr.mxu0 0.0
  %993 = vmatpush1.msra.mxu0 0.0
  %994 = vmatprep.subr.mxu0 0.0
  %995 = vmatpush1.msra.mxu0 0.0
  %996 = vmatprep.subr.mxu0 0.0
  %997 = vmatpush1.msra.mxu0 0.0
  %998 = vmatprep.subr.mxu0 0.0
  %999 = vmatpush1.msra.mxu0 0.0
  %1000 = vmatprep.subr.mxu0 0.0
  %1001 = vmatpush1.msra.mxu0 0.0
  %1002 = vmatprep.subr.mxu0 0.0
  %1003 = vmatpush1.msra.mxu0 0.0
  %1004 = vmatprep.subr.mxu0 0.0
  %1005 = vmatpush1.msra.mxu0 0.0
  %1006 = vmatprep.subr.mxu0 0.0
  %1007 = vmatpush1.msra.mxu0 0.0
  %1008 = vmatprep.subr.mxu0 0.0
  %1009 = vmatpush1.msra.mxu0 0.0
  %1010 = vmatprep.subr.mxu0 0.0
  %1011 = vmatpush1.msra.mxu0 0.0
  %1012 = vmatprep.subr.mxu0 0.0
  %1013 = vmatpush1.msra.mxu0 0.0
  %1014 = vmatprep.subr.mxu0 0.0
  %1015 = vmatpush1.msra.mxu0 0.0
  %1016 = vmatprep.subr.mxu0 0.0
  %1017 = vmatpush1.msra.mxu0 0.0
  %1018 = vmatprep.subr.mxu0 0.0
  %1019 = vmatpush1.msra.mxu0 0.0
  %1020 = vmatprep.subr.mxu0 0.0
  %1021 = vmatpush1.msra.mxu0 0.0
  %1022 = vmatprep.mubr.f32.mxu0 0.0
  %1023 = vmatmul.mubr.f32.gmra.mrb[0].mxu0 %v947
  %v1024 = vpop.f32.mrb[0].mxu0
  %v1025 = vadd.f32 %v834, %v1024
  %v1026 = vpop.f32.mrb[0].mxu0
  %v1027 = vadd.f32 %v836, %v1026
  %1028 = vmatprep.mubr.f32.mxu0 0.0
  %1029 = vmatmul.mubr.f32.gmra.mrb[0].mxu0 %v950
  %v1030 = vpop.f32.mrb[0].mxu0
  %v1031 = vadd.f32 %v840, %v1030
  %v1032 = vpop.f32.mrb[0].mxu0
  %v1033 = vadd.f32 %v842, %v1032
  %1034 = vmatprep.mubr.f32.mxu0 0.0
  %1035 = vmatmul.mubr.f32.gmra.mrb[0].mxu0 %v953
  %v1036 = vpop.f32.mrb[0].mxu0
  %v1037 = vadd.f32 %v846, %v1036
  %v1038 = vpop.f32.mrb[0].mxu0
  %v1039 = vadd.f32 %v848, %v1038
  %1040 = vmatprep.mubr.f32.mxu0 0.0
  %1041 = vmatmul.mubr.f32.gmra.mrb[0].mxu0 %v956
  %v1042 = vpop.f32.mrb[0].mxu0
  %v1043 = vadd.f32 %v852, %v1042
  %v1044 = vpop.f32.mrb[0].mxu0
  %v1045 = vadd.f32 %v854, %v1044
  %1046 = vdwg.mxu0
  %1047 = vmatprep.subr.mxu0 %v746
  %1048 = vmatpush1.msra.mxu0 %v745
  %1049 = vmatprep.subr.mxu0 0.0
  %1050 = vmatpush1.msra.mxu0 0.0
  %1051 = vmatprep.subr.mxu0 0.0
  %1052 = vmatpush1.msra.mxu0 0.0
  %1053 = vmatprep.subr.mxu0 0.0
  %1054 = vmatpush1.msra.mxu0 0.0
  %1055 = vmatprep.subr.mxu0 0.0
  %1056 = vmatpush1.msra.mxu0 0.0
  %1057 = vmatprep.subr.mxu0 0.0
  %1058 = vmatpush1.msra.mxu0 0.0
  %1059 = vmatprep.subr.mxu0 0.0
  %1060 = vmatpush1.msra.mxu0 0.0
  %1061 = vmatprep.subr.mxu0 0.0
  %1062 = vmatpush1.msra.mxu0 0.0
  %1063 = vmatprep.subr.mxu0 0.0
  %1064 = vmatpush1.msra.mxu0 0.0
  %1065 = vmatprep.subr.mxu0 0.0
  %1066 = vmatpush1.msra.mxu0 0.0
  %1067 = vmatprep.subr.mxu0 0.0
  %1068 = vmatpush1.msra.mxu0 0.0
  %1069 = vmatprep.subr.mxu0 0.0
  %1070 = vmatpush1.msra.mxu0 0.0
  %1071 = vmatprep.subr.mxu0 0.0
  %1072 = vmatpush1.msra.mxu0 0.0
  %1073 = vmatprep.subr.mxu0 0.0
  %1074 = vmatpush1.msra.mxu0 0.0
  %1075 = vmatprep.subr.mxu0 0.0
  %1076 = vmatpush1.msra.mxu0 0.0
  %1077 = vmatprep.subr.mxu0 0.0
  %1078 = vmatpush1.msra.mxu0 0.0
  %1079 = vmatprep.subr.mxu0 0.0
  %1080 = vmatpush1.msra.mxu0 0.0
  %1081 = vmatprep.subr.mxu0 0.0
  %1082 = vmatpush1.msra.mxu0 0.0
  %1083 = vmatprep.subr.mxu0 0.0
  %1084 = vmatpush1.msra.mxu0 0.0
  %1085 = vmatprep.subr.mxu0 0.0
  %1086 = vmatpush1.msra.mxu0 0.0
  %1087 = vmatprep.subr.mxu0 0.0
  %1088 = vmatpush1.msra.mxu0 0.0
  %1089 = vmatprep.subr.mxu0 0.0
  %1090 = vmatpush1.msra.mxu0 0.0
  %1091 = vmatprep.subr.mxu0 0.0
  %1092 = vmatpush1.msra.mxu0 0.0
  %1093 = vmatprep.subr.mxu0 0.0
  %1094 = vmatpush1.msra.mxu0 0.0
  %1095 = vmatprep.subr.mxu0 0.0
  %1096 = vmatpush1.msra.mxu0 0.0
  %1097 = vmatprep.subr.mxu0 0.0
  %1098 = vmatpush1.msra.mxu0 0.0
  %1099 = vmatprep.subr.mxu0 0.0
  %1100 = vmatpush1.msra.mxu0 0.0
  %1101 = vmatprep.subr.mxu0 0.0
  %1102 = vmatpush1.msra.mxu0 0.0
  %1103 = vmatprep.subr.mxu0 0.0
  %1104 = vmatpush1.msra.mxu0 0.0
  %1105 = vmatprep.subr.mxu0 0.0
  %1106 = vmatpush1.msra.mxu0 0.0
  %1107 = vmatprep.subr.mxu0 0.0
  %1108 = vmatpush1.msra.mxu0 0.0
  %1109 = vmatprep.subr.mxu0 0.0
  %1110 = vmatpush1.msra.mxu0 0.0
  %1111 = vmatprep.mubr.f32.mxu0 0.0
  %1112 = vmatmul.mubr.f32.gmra.mrb[0].mxu0 %v947
  %v1113 = vpop.f32.mrb[0].mxu0
  %v1114 = vadd.f32 %v923, %v1113
  %v1115 = vpop.f32.mrb[0].mxu0
  %v1116 = vadd.f32 %v925, %v1115
  %1117 = vmatprep.mubr.f32.mxu0 0.0
  %1118 = vmatmul.mubr.f32.gmra.mrb[0].mxu0 %v950
  %v1119 = vpop.f32.mrb[0].mxu0
  %v1120 = vadd.f32 %v929, %v1119
  %v1121 = vpop.f32.mrb[0].mxu0
  %v1122 = vadd.f32 %v931, %v1121
  %1123 = vmatprep.mubr.f32.mxu0 0.0
  %1124 = vmatmul.mubr.f32.gmra.mrb[0].mxu0 %v953
  %v1125 = vpop.f32.mrb[0].mxu0
  %v1126 = vadd.f32 %v935, %v1125
  %v1127 = vpop.f32.mrb[0].mxu0
  %v1128 = vadd.f32 %v937, %v1127
  %1129 = vmatprep.mubr.f32.mxu0 0.0
  %1130 = vmatmul.mubr.f32.gmra.mrb[0].mxu0 %v956
  %v1131 = vpop.f32.mrb[0].mxu0
  %v1132 = vadd.f32 %v941, %v1131
  %v1133 = vpop.f32.mrb[0].mxu0
  %v1134 = vadd.f32 %v943, %v1133
  %1135 = vdwg.mxu0
  %v1136 = vld [vmem:[%s8] sm:$0xff]
  %v1137 = vld [vmem:[%s8 + $0x8] sm:$0xff]
  %v1138 = vld [vmem:[%s8 + $0x10] sm:$0xff]
  %v1139 = vld [vmem:[%s8 + $0x18] sm:$0xff]
  %1141 = vset.pattern.permute.xlu0 0
  %1142 = vperm.xlu0 %1141, %v1136
  %v1143 = vpop.permute.xlu0 %1142
  %1146 = vset.pattern.permute.xlu0 0
  %1147 = vperm.xlu0 %1146, %v1137
  %v1148 = vpop.permute.xlu0 %1147
  %1151 = vset.pattern.permute.xlu0 0
  %1152 = vperm.xlu0 %1151, %v1138
  %v1153 = vpop.permute.xlu0 %1152
  %1156 = vset.pattern.permute.xlu0 0
  %1157 = vperm.xlu0 %1156, %v1139
  %v1158 = vpop.permute.xlu0 %1157
  %v1160 = vadd.f32 %v1025, %v1143
  %v1161 = vadd.f32 %v1027, %v1143
  %v1162 = vadd.f32 %v1114, %v1143
  %v1163 = vadd.f32 %v1116, %v1143
  %v1164 = vadd.f32 %v1031, %v1148
  %v1165 = vadd.f32 %v1033, %v1148
  %v1166 = vadd.f32 %v1120, %v1148
  %v1167 = vadd.f32 %v1122, %v1148
  %v1168 = vadd.f32 %v1037, %v1153
  %v1169 = vadd.f32 %v1039, %v1153
  %v1170 = vadd.f32 %v1126, %v1153
  %v1171 = vadd.f32 %v1128, %v1153
  %v1172 = vadd.f32 %v1043, %v1158
  %v1173 = vadd.f32 %v1045, %v1158
  %v1174 = vadd.f32 %v1132, %v1158
  %v1175 = vadd.f32 %v1134, %v1158
  %v1176 = vmax.f32 %v1160, 0.0
  %v1177 = vmax.f32 %v1161, 0.0
  %v1178 = vmax.f32 %v1162, 0.0
  %v1179 = vmax.f32 %v1163, 0.0
  %v1180 = vmax.f32 %v1164, 0.0
  %v1181 = vmax.f32 %v1165, 0.0
  %v1182 = vmax.f32 %v1166, 0.0
  %v1183 = vmax.f32 %v1167, 0.0
  %v1184 = vmax.f32 %v1168, 0.0
  %v1185 = vmax.f32 %v1169, 0.0
  %v1186 = vmax.f32 %v1170, 0.0
  %v1187 = vmax.f32 %v1171, 0.0
  %v1188 = vmax.f32 %v1172, 0.0
  %v1189 = vmax.f32 %v1173, 0.0
  %v1190 = vmax.f32 %v1174, 0.0
  %v1191 = vmax.f32 %v1175, 0.0
  %1192 = vst [vmem:[%s9] sm:$0xff] %v1176
  %1193 = vst [vmem:[%s9 + $0x8] sm:$0xff] %v1177
  %1194 = vst [vmem:[%s9 + $0x10] sm:$0xff] %v1178
  %1195 = vst [vmem:[%s9 + $0x18] sm:$0xff] %v1179
  %1196 = vst [vmem:[%s9 + $0x20] sm:$0xff] %v1180
  %1197 = vst [vmem:[%s9 + $0x28] sm:$0xff] %v1181
  %1198 = vst [vmem:[%s9 + $0x30] sm:$0xff] %v1182
  %1199 = vst [vmem:[%s9 + $0x38] sm:$0xff] %v1183
  %1200 = vst [vmem:[%s9 + $0x40] sm:$0xff] %v1184
  %1201 = vst [vmem:[%s9 + $0x48] sm:$0xff] %v1185
  %1202 = vst [vmem:[%s9 + $0x50] sm:$0xff] %v1186
  %1203 = vst [vmem:[%s9 + $0x58] sm:$0xff] %v1187
  %1204 = vst [vmem:[%s9 + $0x60] sm:$0xff] %v1188
  %1205 = vst [vmem:[%s9 + $0x68] sm:$0xff] %v1189
  %1206 = vst [vmem:[%s9 + $0x70] sm:$0xff] %v1190
  %1207 = vst [vmem:[%s9 + $0x78] sm:$0xff] %v1191
  // Predicated region
  $region38: #{bottleneck_block.1} parent=0 // pred_check
    _
  $region39: #{bottleneck_block.1} parent=0 // pred_check_branch
    %1209 = sbr.rel (0) target = $region41
  $region40: #{bottleneck_block.1} parent=0 // pred_region
    _
  $region41: #{bottleneck_block.1} parent=0 // pred_fallthru
    _
  // Predicated region
  $region42: #{bottleneck_block.1} parent=0 // pred_check
    _
  $region43: #{bottleneck_block.1} parent=0 // pred_check_branch
    %1211 = sbr.rel (0) target = $region45
  $region44: #{bottleneck_block.1} parent=0 // pred_region
    _
  $region45: #{bottleneck_block.1} parent=0 // pred_fallthru
    _

</llo_original>
